<compile_context>
chip_gen: v5e
topology: v5e:2x2
jax: 0.10.0
libtpu: 0.0.40
codegen_flags: <defaults>
</compile_context>

<pallas_src>
import functools

import jax
import jax.numpy as jnp
from jax import lax
from jax.experimental import pallas as pl
from jax.experimental.pallas import tpu as pltpu


def _h_sigmoid(y):
    """h_sigmoid(y) = relu6(y + 3) / 6  (the spec module, usable in-kernel)."""
    return jnp.clip(y + 3.0, 0.0, 6.0) * (1.0 / 6.0)


# ---------------------------------------------------------------------------
# Standalone h_sigmoid kernel (lane-dense elementwise, no host pad/slice).
# ---------------------------------------------------------------------------
def _h_sigmoid_kernel(x_ref, o_ref):
    o_ref[...] = _h_sigmoid(x_ref[...])


def h_sigmoid_forward(x, *, target_block_bytes=4 * 1024 * 1024):
    """Elementwise relu6(x+3)/6 over an arbitrary-shaped array.

    The 128-divisible bulk of the flattened array is viewed (free reshape) as a
    lane-dense (rows, lanes) 2-D array and processed in ~target_block_bytes
    blocks; any <128-element tail is handled outside the kernel.  No host-side
    padding or output slicing (those were full extra HBM passes).
    """
    shape, dtype = x.shape, x.dtype
    n = x.size
    if n == 0:
        return x
    flat = x.reshape(-1)                       # free (contiguous)
    rem = n % 128
    bulk = n - rem
    pieces = []
    if bulk:
        itemsize = jnp.dtype(dtype).itemsize
        lanes = 128
        for cand in (1024, 512, 256):          # widest lane count that divides
            if bulk % cand == 0 and bulk // cand >= 8:
                lanes = cand
                break
        rows = bulk // lanes
        br_target = max(8, target_block_bytes // (lanes * itemsize))
        br = rows if rows <= br_target else (br_target // 8) * 8
        x2 = (flat if rem == 0 else flat[:bulk]).reshape(rows, lanes)
        blk_bytes = br * lanes * itemsize
        # 2x double-buffered in + out blocks, plus headroom (v5e default is 16MiB)
        vmem_limit = int(min(96 * 2**20,
                             max(24 * 2**20, 4 * blk_bytes + (4 << 20))))
        out2 = pl.pallas_call(
            _h_sigmoid_kernel,
            out_shape=jax.ShapeDtypeStruct((rows, lanes), dtype),
            grid=(pl.cdiv(rows, br),),
            in_specs=[pl.BlockSpec((br, lanes), lambda i: (i, 0))],
            out_specs=pl.BlockSpec((br, lanes), lambda i: (i, 0)),
            compiler_params=pltpu.CompilerParams(
                dimension_semantics=("parallel",),
                vmem_limit_bytes=vmem_limit),
        )(x2)
        pieces.append(out2.reshape(-1))
    if rem:
        # tiny (<128 element) remainder: handled outside the kernel
        pieces.append(_h_sigmoid(flat[bulk:]).astype(dtype))
    out = pieces[0] if len(pieces) == 1 else jnp.concatenate(pieces)
    return out.reshape(shape)


# ---------------------------------------------------------------------------
# CAConv kernel (channel-major, lane-dense; reuses h_sigmoid for h_swish).
# ---------------------------------------------------------------------------
def _caconv_kernel(x_ref, pool_ref, w1_ref, whw_ref, eh_ref, ew_ref,
                   wconv_ref, mask_ref, bias_ref, down_ref, o_ref, attp_ref,
                   *, nb, H, W, Cin, Cout, mip, K, P, stride, cdt):
    """Per-batch-block CAConv forward.

    x_ref:     (nb, Cin, H*W)     input tile, lane-dense (spatial on lanes)
    pool_ref:  (H*W, H+W)         [mean over W | mean over H] pooling matrix
    w1_ref:    (mip, Cin)         conv1 (1x1) weight, BN folded
    whw_ref:   (2*Cin, mip)       [conv_h ; conv_w] weights stacked
    eh_ref:    (H, H*W)           one-hot gate expansion along h
    ew_ref:    (W, H*W)           one-hot gate expansion along w
    wconv_ref: (K*K, Cout, Cin)   final conv weight, one (Cout, Cin) slab / tap
    mask_ref:  (K*K, H*W)         0/1 validity of each tap at each position
    bias_ref:  (mip+2Cin+Cout, 1) packed bias column (f32)
    down_ref:  (H*W, Ho*Wo) or (1,1) dummy  stride subsampling (stride > 1 only)
    o_ref:     (nb, Cout, Ho*Wo)  lane-dense output block
    attp_ref:  (Cin, H*W + 2*P*(W+1)) VMEM scratch for shifted tap reads
    """
    f32 = jnp.float32
    HW = H * W
    pad = P * (W + 1)                              # max |lane shift| of a tap

    b_all = bias_ref[...]                          # (mip + 2Cin + Cout, 1)
    b1 = b_all[0:mip]                              # (mip, 1)
    bhw = b_all[mip:mip + 2 * Cin]                 # (2Cin, 1)
    bconv = b_all[mip + 2 * Cin:]                  # (Cout, 1)

    pool = pool_ref[...]
    w1 = w1_ref[...]
    whw = whw_ref[...]
    eh = eh_ref[...]
    ew = ew_ref[...]
    wtaps = wconv_ref[...]                         # (K*K, Cout, Cin)
    masks = mask_ref[...]                          # (K*K, HW)

    # Zero the lane border of the shift scratch EVERY grid step (not keyed on
    # program_id == 0), so it is safe when the batch axis is sharded across
    # v7x's two TensorCores.
    if pad:
        zeros_edge = jnp.zeros((Cin, pad), cdt)
        attp_ref[:, :pad] = zeros_edge
        attp_ref[:, pad + HW:] = zeros_edge

    for n in range(nb):                            # static, small
        xn = x_ref[n]                              # (Cin, HW) f32, lane-dense

        # coordinate pooling: [mean over W | mean over H] as one small dot
        pooled = jnp.dot(xn.astype(cdt), pool,
                         preferred_element_type=f32)                 # (Cin, H+W)
        # shared 1x1 conv (BN folded on host) + h_swish (reuses h_sigmoid)
        y = jnp.dot(w1, pooled.astype(cdt),
                    preferred_element_type=f32) + b1                 # (mip, H+W)
        y = y * _h_sigmoid(y)
        # conv_h | conv_w fused into one dot, then the sigmoid gates
        a = jax.nn.sigmoid(
            jnp.dot(whw, y.astype(cdt), preferred_element_type=f32) + bhw)
        a_h = a[:Cin, :H]                          # (Cin, H)
        a_w = a[Cin:, H:]                          # (Cin, W)
        # expand gates to lane-dense (Cin, HW) with two tiny one-hot dots
        gate = (jnp.dot(a_h.astype(cdt), eh, preferred_element_type=f32) *
                jnp.dot(a_w.astype(cdt), ew, preferred_element_type=f32))
        att = (xn * gate).astype(cdt)              # (Cin, HW) gated activation

        # final KxK conv: K*K (Cout,Cin)x(Cin,HW) dots accumulated in f32.
        # Each shifted tap is a static ref slice of the small lane-padded
        # scratch (no whole-frame pad tensor, no im2col buffer, no big masked
        # stores); the 0/1 mask kills contributions from outside the image.
        attp_ref[:, pad:pad + HW] = att
        acc = jnp.zeros((Cout, HW), f32)
        for kh in range(K):
            for kw in range(K):
                t = kh * K + kw
                s0 = pad + (kh - P) * W + (kw - P)
                piece = attp_ref[:, s0:s0 + HW] * masks[t:t + 1]
                acc = acc + jnp.dot(wtaps[t], piece,
                                    preferred_element_type=f32)
        if stride > 1:
            acc = jnp.dot(acc.astype(cdt), down_ref[...],
                          preferred_element_type=f32)
        o_ref[n] = (acc + bconv).astype(o_ref.dtype)


def caconv_forward(x_nchw, params, kernel_size, stride, *, nb=None,
                   compute_dtype=jnp.float32):
    """CAConv forward (eval-mode BN).  x_nchw: (N, Cin, H, W) -> (N, Cout, Ho, Wo)."""
    K = int(kernel_size)
    P = K // 2
    stride = int(stride)
    # TODO(synk): even kernel_size needs asymmetric 'same' padding; odd-K only.
    assert K % 2 == 1
    N, Cin, H, W = x_nchw.shape
    HW = H * W
    Hout = (H + 2 * P - K) // stride + 1
    Wout = (W + 2 * P - K) // stride + 1
    HoWo = Hout * Wout
    eps = 1e-5
    f32 = jnp.float32
    cdt = compute_dtype

    # NCHW consumed directly: only a free trailing-dims reshape, no transpose.
    x = x_nchw.reshape(N, Cin, HW).astype(f32)

    # batch block: amortize the ~0.35us/step cost, but keep >= 2 grid steps so
    # both v7x TensorCores get work; nb always divides N (no silent reset).
    if nb is None:
        nb = max(1, min(N, -(-512 // HoWo)))
        while nb > 1 and (N % nb != 0 or N // nb < 2):
            nb -= 1
    assert N % nb == 0, (N, nb)

    # ---- host-side one-time folding of the (tiny) parameters --------------
    s = params["bn_gamma"] / jnp.sqrt(params["bn_var"] + eps)
    w1 = (params["w_conv1"][:, :, 0, 0] * s[:, None]).astype(cdt)    # (mip, Cin)
    mip = w1.shape[0]
    b1 = (params["b_conv1"] - params["bn_mean"]) * s + params["bn_beta"]
    whw = jnp.concatenate([params["w_conv_h"][:, :, 0, 0],
                           params["w_conv_w"][:, :, 0, 0]],
                          axis=0).astype(cdt)                        # (2Cin, mip)
    bhw = jnp.concatenate([params["b_conv_h"], params["b_conv_w"]])
    Cout = params["w_conv"].shape[0]
    wconv = jnp.transpose(params["w_conv"], (2, 3, 0, 1)).reshape(
        K * K, Cout, Cin).astype(cdt)                                # (K*K, Cout, Cin)
    bias_col = jnp.concatenate(
        [b1, bhw, params["b_conv"]]).astype(f32)[:, None]            # (BT, 1)

    # pooling / gate-expansion / tap-validity constants (all tiny, lane-dense)
    p_h = jnp.arange(HW, dtype=jnp.int32) // W
    p_w = jnp.arange(HW, dtype=jnp.int32) % W
    eh = (jnp.arange(H)[:, None] == p_h[None, :]).astype(cdt)        # (H, HW)
    ew = (jnp.arange(W)[:, None] == p_w[None, :]).astype(cdt)        # (W, HW)
    pool = jnp.concatenate(
        [(p_h[:, None] == jnp.arange(H)[None, :]).astype(f32) / W,
         (p_w[:, None] == jnp.arange(W)[None, :]).astype(f32) / H],
        axis=1).astype(cdt)                                          # (HW, H+W)
    mask_list = []
    for kh in range(K):
        for kw in range(K):
            dh, dw = kh - P, kw - P
            mask_list.append((p_h + dh >= 0) & (p_h + dh < H) &
                             (p_w + dw >= 0) & (p_w + dw < W))
    mask_arr = jnp.stack(mask_list).astype(cdt)                      # (K*K, HW)
    if stride > 1:
        q = jnp.arange(HoWo, dtype=jnp.int32)
        src = (q // Wout) * stride * W + (q % Wout) * stride
        down = (jnp.arange(HW, dtype=jnp.int32)[:, None]
                == src[None, :]).astype(cdt)                         # (HW, HoWo)
    else:
        down = jnp.zeros((1, 1), cdt)                                # unused dummy

    kernel = functools.partial(
        _caconv_kernel, nb=nb, H=H, W=W, Cin=Cin, Cout=Cout, mip=mip,
        K=K, P=P, stride=stride, cdt=cdt)

    def const_spec(a):
        return pl.BlockSpec(a.shape, lambda n, _nd=a.ndim: (0,) * _nd)

    # explicit VMEM budget: blocks + constants are tiny now that there is no
    # whole-frame pad / im2col scratch (safe headroom even on v7x's 64 MiB/TC).
    blk_bytes = (nb * Cin * HW + nb * Cout * HoWo) * 4
    const_bytes = sum(int(a.size) * jnp.dtype(a.dtype).itemsize for a in
                      (pool, w1, whw, eh, ew, wconv, mask_arr, bias_col, down))
    vmem_limit = int(min(48 * 2**20,
                         max(16 * 2**20,
                             4 * blk_bytes + 2 * const_bytes + (2 << 20))))

    out = pl.pallas_call(
        kernel,
        out_shape=jax.ShapeDtypeStruct((N, Cout, HoWo), f32),
        grid=(N // nb,),
        in_specs=[pl.BlockSpec((nb, Cin, HW), lambda n: (n, 0, 0)),
                  const_spec(pool), const_spec(w1), const_spec(whw),
                  const_spec(eh), const_spec(ew), const_spec(wconv),
                  const_spec(mask_arr), const_spec(bias_col), const_spec(down)],
        out_specs=pl.BlockSpec((nb, Cout, HoWo), lambda n: (n, 0, 0)),
        scratch_shapes=[pltpu.VMEM((Cin, HW + 2 * P * (W + 1)), cdt)],
        compiler_params=pltpu.CompilerParams(
            dimension_semantics=("parallel",),      # batch axis -> v7x 2 TCs
            vmem_limit_bytes=vmem_limit),
    )(x, pool, w1, whw, eh, ew, wconv, mask_arr, bias_col, down)

    # free reshape (split trailing dim) back to NCHW; no transpose needed.
    return out.reshape(N, Cout, Hout, Wout)


# ---------------------------------------------------------------------------
# Pure-JAX reference (mirrors the PyTorch forward, eval-mode BN).
# ---------------------------------------------------------------------------
def reference(x_nchw, params, kernel_size, stride):
    K = int(kernel_size)
    P = K // 2
    eps = 1e-5
    n, c, h, w = x_nchw.shape
    x_h = jnp.mean(x_nchw, axis=3, keepdims=True)
    x_w = jnp.transpose(jnp.mean(x_nchw, axis=2, keepdims=True), (0, 1, 3, 2))
    y = jnp.concatenate([x_h, x_w], axis=2)

    def conv1x1(v, wgt, b):
        return (jnp.einsum("nchw,oc->nohw", v, wgt[:, :, 0, 0])
                + b[None, :, None, None])

    y = conv1x1(y, params["w_conv1"], params["b_conv1"])
    g = params["bn_gamma"][None, :, None, None]
    bta = params["bn_beta"][None, :, None, None]
    mu = params["bn_mean"][None, :, None, None]
    var = params["bn_var"][None, :, None, None]
    y = (y - mu) / jnp.sqrt(var + eps) * g + bta
    y = y * jnp.clip(y + 3.0, 0.0, 6.0) / 6.0
    yh, yw = y[:, :, :h, :], y[:, :, h:, :]
    yw = jnp.transpose(yw, (0, 1, 3, 2))
    a_h = jax.nn.sigmoid(conv1x1(yh, params["w_conv_h"], params["b_conv_h"]))
    a_w = jax.nn.sigmoid(conv1x1(yw, params["w_conv_w"], params["b_conv_w"]))
    out = x_nchw * a_w * a_h
    out = lax.conv_general_dilated(
        out, params["w_conv"], window_strides=(stride, stride),
        padding=[(P, P), (P, P)],
        dimension_numbers=("NCHW", "OIHW", "NCHW"),
        preferred_element_type=jnp.float32,
    ) + params["b_conv"][None, :, None, None]
    return out


if __name__ == "__main__":
    # Small, module-consistent shapes: CAConv(inp=4, oup=8, kernel_size=3, stride=1)
    N, Cin, H, W = 2, 4, 16, 16
    Cout, K, stride, reduction = 8, 3, 1, 32
    mip = max(8, Cin // reduction)

    keys = jax.random.split(jax.random.PRNGKey(0), 15)
    params = dict(
        w_conv1=jax.random.normal(keys[0], (mip, Cin, 1, 1), jnp.float32) * 0.2,
        b_conv1=jax.random.normal(keys[1], (mip,), jnp.float32) * 0.1,
        bn_gamma=1.0 + 0.1 * jax.random.normal(keys[2], (mip,), jnp.float32),
        bn_beta=0.1 * jax.random.normal(keys[3], (mip,), jnp.float32),
        bn_mean=0.1 * jax.random.normal(keys[4], (mip,), jnp.float32),
        bn_var=jax.random.uniform(keys[5], (mip,), jnp.float32,
                                  minval=0.5, maxval=1.5),
        w_conv_h=jax.random.normal(keys[6], (Cin, mip, 1, 1), jnp.float32) * 0.2,
        b_conv_h=jax.random.normal(keys[7], (Cin,), jnp.float32) * 0.1,
        w_conv_w=jax.random.normal(keys[8], (Cin, mip, 1, 1), jnp.float32) * 0.2,
        b_conv_w=jax.random.normal(keys[9], (Cin,), jnp.float32) * 0.1,
        w_conv=jax.random.normal(keys[10], (Cout, Cin, K, K), jnp.float32) * 0.2,
        b_conv=jax.random.normal(keys[11], (Cout,), jnp.float32) * 0.1,
    )
    x = jax.random.normal(keys[12], (N, Cin, H, W), jnp.float32)

    # --- standalone h_sigmoid kernel (the spec module) ----------------------
    hs = jax.block_until_ready(h_sigmoid_forward(x))
    hs_ref = jnp.clip(x + 3.0, 0.0, 6.0) / 6.0
    assert hs.shape == x.shape, (hs.shape, x.shape)
    assert jnp.allclose(hs, hs_ref, atol=1e-6), \
        float(jnp.max(jnp.abs(hs - hs_ref)))

    # odd total size: kernel handles the 128-divisible bulk, jnp the tiny tail
    x_odd = jax.random.normal(keys[13], (5, 7, 11), jnp.float32)
    hs_odd = jax.block_until_ready(h_sigmoid_forward(x_odd))
    assert jnp.allclose(hs_odd, jnp.clip(x_odd + 3.0, 0.0, 6.0) / 6.0,
                        atol=1e-6)

    # multi-step grid (larger tensor with a small block target)
    x_big = jax.random.normal(keys[14], (1024, 128), jnp.float32)
    hs_big = jax.block_until_ready(
        h_sigmoid_forward(x_big, target_block_bytes=64 * 1024))
    assert jnp.allclose(hs_big, jnp.clip(x_big + 3.0, 0.0, 6.0) / 6.0,
                        atol=1e-6)

    # --- CAConv block (reuses h_sigmoid inside h_swish), f32 compute path ---
    out = jax.block_until_ready(caconv_forward(x, params, K, stride))
    ref = reference(x, params, K, stride)
    assert out.shape == ref.shape, (out.shape, ref.shape)
    # both sides use TPU default matmul precision; tolerance sized accordingly
    assert jnp.allclose(out, ref, atol=1e-2, rtol=1e-2), \
        float(jnp.max(jnp.abs(out - ref)))

    print("KERNEL_OK")
</pallas_src>

<mosaic_0001>
module attributes {stable_mosaic.version = 11 : i64} {
  func.func @_h_sigmoid_kernel(%arg0: i32, %arg1: memref<8x256xf32, #tpu.memory_space<vmem>>, %arg2: memref<8x256xf32, #tpu.memory_space<vmem>>) attributes {dimension_semantics = [#tpu.dimension_semantics<parallel>], iteration_bounds = array<i64: 1>, scalar_prefetch = 0 : i64, scratch_operands = 0 : i64, tpu.core_type = #tpu.core_type<tc>, window_params = [{transform_indices = @transform_0, window_bounds = array<i64: 8, 256>}, {transform_indices = @transform_1, window_bounds = array<i64: 8, 256>}]} {
    %c0 = arith.constant 0 : index
    %c0_0 = arith.constant 0 : index
    %0 = vector.load %arg1[%c0, %c0_0] : memref<8x256xf32, #tpu.memory_space<vmem>>, vector<8x256xf32>
    %cst = arith.constant 3.000000e+00 : f32
    %1 = vector.broadcast %cst : f32 to vector<8x256xf32>
    %2 = arith.addf %0, %1 : vector<8x256xf32>
    %cst_1 = arith.constant 0.000000e+00 : f32
    %cst_2 = arith.constant 6.000000e+00 : f32
    %3 = vector.broadcast %cst_1 : f32 to vector<8x256xf32>
    %4 = arith.maximumf %3, %2 : vector<8x256xf32>
    %5 = vector.broadcast %cst_2 : f32 to vector<8x256xf32>
    %6 = arith.minimumf %5, %4 : vector<8x256xf32>
    %cst_3 = arith.constant 0.166666672 : f32
    %7 = vector.broadcast %cst_3 : f32 to vector<8x256xf32>
    %8 = arith.mulf %6, %7 : vector<8x256xf32>
    %c0_4 = arith.constant 0 : index
    %c0_5 = arith.constant 0 : index
    %9 = vector.load %arg2[%c0_4, %c0_5] : memref<8x256xf32, #tpu.memory_space<vmem>>, vector<8x256xf32>
    tpu.vector_store %arg2[%c0_4, %c0_5], %8 {strides = array<i32>} : memref<8x256xf32, #tpu.memory_space<vmem>>, vector<8x256xf32>,
    return
  }
  func.func @transform_0(%arg0: i32) -> (i32, i32) {
    %c0_i32 = arith.constant 0 : i32
    %c0_i32_0 = arith.constant 0 : i32
    return %arg0, %c0_i32 : i32, i32
  }
  func.func @transform_1(%arg0: i32) -> (i32, i32) {
    %c0_i32 = arith.constant 0 : i32
    %c0_i32_0 = arith.constant 0 : i32
    return %arg0, %c0_i32 : i32, i32
  }
}

</mosaic_0001>

<llo_original>
// kernel: tpu_custom_call.1
$region0: #{tpu_custom_call.1}
  #allocation0 [shape = 'u32[]', space=smem, size = 0x4, offset = 0x4, fixed_abs, tag = 'smem constant byte address 0x4 - core index']
  #allocation1 [shape = 'u32[72,128]{1,0:T(1,128)}', space=vmem, size = 0x9000, scoped, tag = 'internal scratch']
  %s0 = inlined_call_operand.hbm [shape: f32[8,256], index: 0, kind: input, shape index: {}]
  %s1 = inlined_call_operand.hbm [shape: f32[8,256], index: 1, kind: output, shape index: {}]
  %s2 = sld [smem:[#allocation0]]
  $region18: #{tpu_custom_call.1} parent=0
    _
  %s4 = ssub.s32 1, %s2
  %s5 = scalar_select 0, %s4, %s2
  $region1: #{tpu_custom_call.1} parent=0
    #allocation2 [shape = 'u8[8192]{0}', space=vmem, size = 0x2000, scoped, tag = 'input window, operand 0, single buffered']
    #allocation3 [shape = 's32[1]{0}', space=sflag, size = 0x4, scoped, tag = 'scoped memory for tpu_custom_call.1']
    #allocation4 [shape = 's32[1]{0}', space=sflag, size = 0x4, scoped, tag = 'scoped memory for tpu_custom_call.1']
    #allocation5 [shape = 'u8[8192]{0}', space=vmem, size = 0x2000, scoped, tag = 'output window, operand 0, single buffered']
    %6 = vsyncpa [#allocation3], 0
    %7 = vsyncpa [#allocation4], 0
    // Predicated region
    $region2: #{tpu_custom_call.1} parent=1 // pred_check
      _
    $region3: #{tpu_custom_call.1} parent=1 // pred_check_branch
      %9 = sbr.rel (0) target = $region5
    $region4: #{tpu_custom_call.1} parent=1 // pred_region
      %11 = vsyncadd [#allocation3], 0
      %s13 = sshll.u32 %s0, 4
      %s14 = int_to_ptr.hbm [resolvable:$true] %s13
      %s15 = sshll.u32 [#allocation2], 4
      %s16 = int_to_ptr.vmem [resolvable:$true] %s15
      %18 = dma.hbm_to_vmem [thread:$0]  %s14, 256, %s16, [#allocation3]
    $region5: #{tpu_custom_call.1} parent=1 // pred_fallthru
      _
    // Predicated region
    $region6: #{tpu_custom_call.1} parent=1 // pred_check
      _
    $region7: #{tpu_custom_call.1} parent=1 // pred_check_branch
      %20 = sbr.rel (0) target = $region9
    $region8: #{tpu_custom_call.1} parent=1 // pred_region
      %22 = dma.done [#allocation3], 256
    $region9: #{tpu_custom_call.1} parent=1 // pred_fallthru
      _
    %v23 = vld [vmem:[#allocation2] sm:$0xff]
    %v24 = vld [vmem:[#allocation2 + $0x8] sm:$0xff]
    %v25 = vadd.f32 %v23, 3.0
    %v26 = vadd.f32 %v24, 3.0
    %v27 = vmax.f32 %v25, 0.0
    %v28 = vmax.f32 %v26, 0.0
    %v29 = vmin.f32 %v27, 6.0
    %v30 = vmin.f32 %v28, 6.0
    %v31 = vmul.f32 %v29, 0.16666667
    %v32 = vmul.f32 %v30, 0.16666667
    %33 = vst [vmem:[#allocation5] sm:$0xff] %v31
    %34 = vst [vmem:[#allocation5 + $0x8] sm:$0xff] %v32
    // Predicated region
    $region10: #{tpu_custom_call.1} parent=1 // pred_check
      _
    $region11: #{tpu_custom_call.1} parent=1 // pred_check_branch
      %36 = sbr.rel (0) target = $region13
    $region12: #{tpu_custom_call.1} parent=1 // pred_region
      %38 = vsyncadd [#allocation4], 0
      %s40 = sshll.u32 [#allocation5], 4
      %s41 = int_to_ptr.vmem [resolvable:$true] %s40
      %s42 = sshll.u32 %s1, 4
      %s43 = int_to_ptr.hbm [resolvable:$true] %s42
      %45 = dma.vmem_to_hbm [thread:$0]  %s41, 256, %s43, [#allocation4]
    $region13: #{tpu_custom_call.1} parent=1 // pred_fallthru
      _
    // Predicated region
    $region14: #{tpu_custom_call.1} parent=1 // pred_check
      _
    $region15: #{tpu_custom_call.1} parent=1 // pred_check_branch
      %47 = sbr.rel (0) target = $region17
    $region16: #{tpu_custom_call.1} parent=1 // pred_region
      %49 = dma.done [#allocation4], 256
    $region17: #{tpu_custom_call.1} parent=1 // pred_fallthru
      _
    %50 = vsyncpa [#allocation3], 1
    %51 = vsyncpa [#allocation4], 1

</llo_original>
